<compile_context>
chip_gen: v7x
topology: tpu7x:2x2x1
jax: 0.10.0
libtpu: 0.0.40
codegen_flags: <defaults>
</compile_context>

<pallas_src>
import functools

import numpy as np
import jax
import jax.numpy as jnp
from jax.experimental import pallas as pl
from jax.experimental.pallas import tpu as pltpu


# ----------------------------------------------------------------------------
# helpers (host side, static)
# ----------------------------------------------------------------------------
def _pick_batch_tile(B, max_tile=8):
    """Largest divisor of B that is <= max_tile and still leaves >= 2 grid steps
    (so both TensorCores get work on v7x); falls back to 1."""
    best = 1
    for bt in range(1, min(B, max_tile) + 1):
        if B % bt == 0 and (B // bt >= 2 or B == 1):
            best = bt
    return best


def _pool_select_matrix(bt, L_out, L_pool, pk, ps):
    """0/1 matrix: picks column b*L_out + j*ps of the windowed-max array and routes
    it to output column b*L_pool + j.  Windows that would cross a sample boundary
    in the packed (C, bt*L_out) layout are simply never selected -> exact."""
    Lm = bt * L_out - pk + 1
    sel = np.zeros((Lm, bt * L_pool), dtype=np.float32)
    for b in range(bt):
        for j in range(L_pool):
            sel[b * L_out + j * ps, b * L_pool + j] = 1.0
    return jnp.asarray(sel)


# ----------------------------------------------------------------------------
# fused kernel (built per static config)
# ----------------------------------------------------------------------------
def _make_fused_kernel(conv_meta, num_linear, bt, pk, ps, activ):
    def kernel(*refs):
        x_ref = refs[0]
        o_ref = refs[-1]
        idx = 1

        x = x_ref[...].astype(jnp.float32)                       # (bt, C_in0, L0)
        if bt == 1:
            h = x[0]                                             # (C_in0, L0)
        else:
            h = jnp.concatenate([x[b] for b in range(bt)], axis=1)  # (C_in0, bt*L0)

        # ---- conv + relu + maxpool stack (everything stays in registers) ----
        for (C_in, C_out, K, pad, L_in, L_out, L_pool) in conv_meta:
            w_ref, b_ref, sel_ref = refs[idx], refs[idx + 1], refs[idx + 2]
            idx += 3

            # im2col: one (C_out, K*C_in) @ (K*C_in, bt*L_out) MXU matmul per layer.
            cols = []
            for b in range(bt):
                hb = h[:, b * L_in:(b + 1) * L_in]               # (C_in, L_in)
                if pad > 0:
                    z = jnp.zeros((C_in, pad), jnp.float32)
                    hb = jnp.concatenate([z, hb, z], axis=1)     # (C_in, L_in+2*pad)
                taps = [hb[:, k:k + L_out] for k in range(K)]
                cols.append(jnp.concatenate(taps, axis=0) if K > 1 else taps[0])
            rhs = jnp.concatenate(cols, axis=1) if bt > 1 else cols[0]

            acc = jnp.dot(w_ref[...], rhs, preferred_element_type=jnp.float32)
            acc = acc + b_ref[...]                               # (C_out,1) bcast
            if activ:
                acc = jnp.maximum(acc, 0.0)

            # MaxPool1d(pk, stride=ps): windowed max (VPU) + precomputed 0/1 select.
            Lm = bt * L_out - pk + 1
            m = acc[:, 0:Lm]
            for t in range(1, pk):
                m = jnp.maximum(m, acc[:, t:t + Lm])
            h = jnp.dot(m, sel_ref[...], preferred_element_type=jnp.float32)
            # h: (C_out, bt*L_pool)

        # ---- flatten: (C_last, bt*L_last) -> (bt, C_last*L_last) ----
        # Order inside a sample is l-major; the first linear weight's contraction
        # columns were permuted in the wrapper to match (so this equals nn.Flatten).
        C_last, L_last = conv_meta[-1][1], conv_meta[-1][6]
        gcols = []
        for b in range(bt):
            parts = [h[:, b * L_last + l: b * L_last + l + 1] for l in range(L_last)]
            gcols.append(jnp.concatenate(parts, axis=0) if L_last > 1 else parts[0])
        G = jnp.concatenate(gcols, axis=1) if bt > 1 else gcols[0]   # (flat, bt)
        hl = jnp.transpose(G, (1, 0))                                # (bt, flat)
        # F.dropout(..., training=False) is the identity -> skipped.

        # ---- linear stack ----
        for _ in range(num_linear):
            wl_ref, bl_ref = refs[idx], refs[idx + 1]
            idx += 2
            hl = jnp.dot(hl, wl_ref[...], preferred_element_type=jnp.float32)
            hl = hl + bl_ref[...]
            if activ:
                hl = jnp.maximum(hl, 0.0)

        o_ref[:, 0, :] = hl.astype(o_ref.dtype)

    return kernel


# ----------------------------------------------------------------------------
# wrapper: weight packing + single pallas_call
# ----------------------------------------------------------------------------
def classifier_cnn1d_forward(x, params, cfg):
    B, C0, L0 = x.shape
    pk, ps, ppad = cfg["pool"]
    assert ppad == 0  # TODO(synk): MaxPool1d padding>0 not implemented (cfg uses 0).
    activ = bool(cfg["activ"])
    num_cnn = cfg["num_cnn"]
    num_linear = cfg["num_linear"]
    bt = _pick_batch_tile(B)

    # ---- per-conv-layer static dims + packed operands ----
    conv_meta, conv_inputs = [], []
    L_in, C_in = L0, C0
    for i in range(num_cnn):
        w, b = params["cnn"][i]
        C_out, C_in_w, K = w.shape
        assert C_in_w == C_in
        pad = cfg["conv_io"][i][3]
        L_out = L_in + 2 * pad - K + 1
        L_pool = (L_out - pk) // ps + 1
        conv_meta.append((C_in, C_out, K, pad, L_in, L_out, L_pool))

        w_p = jnp.transpose(w, (0, 2, 1)).reshape(C_out, K * C_in)  # col = k*C_in + c
        b_col = b.reshape(C_out, 1)
        sel = _pool_select_matrix(bt, L_out, L_pool, pk, ps)
        conv_inputs += [w_p.astype(jnp.float32), b_col.astype(jnp.float32), sel]

        L_in, C_in = L_pool, C_out

    C_last, L_last = C_in, L_in
    flat_num = C_last * L_last

    # ---- linear operands ----
    lin_inputs = []
    for i in range(num_linear):
        w, b = params["lin"][i]
        F_out_i, F_in_i = w.shape
        if i == 0:
            assert F_in_i == flat_num
            # permute contraction columns from PyTorch flatten order (c-major) to the
            # kernel's l-major flatten order, and transpose to (in, out).
            w_p = (w.reshape(F_out_i, C_last, L_last)
                    .transpose(2, 1, 0)
                    .reshape(flat_num, F_out_i))
        else:
            w_p = w.T
        lin_inputs += [w_p.astype(jnp.float32),
                       b.reshape(1, F_out_i).astype(jnp.float32)]
    F_final = params["lin"][-1][0].shape[0]

    kernel = _make_fused_kernel(conv_meta, num_linear, bt, pk, ps, activ)

    operands = [x] + conv_inputs + lin_inputs
    in_specs = [pl.BlockSpec((bt, C0, L0), lambda i: (i, 0, 0))]
    for op in conv_inputs + lin_inputs:
        # full-block, constant index map -> resident in VMEM across grid steps.
        in_specs.append(pl.BlockSpec(op.shape, lambda i, nd=op.ndim: (0,) * nd))

    out = pl.pallas_call(
        kernel,
        out_shape=jax.ShapeDtypeStruct((B, 1, F_final), x.dtype),
        grid=(B // bt,),
        in_specs=in_specs,
        out_specs=pl.BlockSpec((bt, 1, F_final), lambda i: (i, 0, 0)),
        compiler_params=pltpu.CompilerParams(
            dimension_semantics=("parallel",)),
    )(*operands)
    return out.reshape(B, F_final)


# ----------------------------------------------------------------------------
# Pure-JAX reference for verification
# ----------------------------------------------------------------------------
def ref_forward(x, params, cfg):
    h = x
    pk, ps, _ = cfg["pool"]
    for i in range(cfg["num_cnn"]):
        w, b = params["cnn"][i]
        pad = cfg["conv_io"][i][3]
        hp = jnp.pad(h, ((0, 0), (0, 0), (pad, pad)))
        C_out, C_in, K = w.shape
        L_out = hp.shape[-1] - K + 1
        acc = jnp.zeros((h.shape[0], C_out, L_out), jnp.float32)
        for k in range(K):
            acc = acc + jnp.einsum("oi,bil->bol", w[:, :, k], hp[:, :, k:k + L_out])
        acc = acc + b[None, :, None]
        if cfg["activ"]:
            acc = jnp.maximum(acc, 0.0)
        L_pool = (L_out - pk) // ps + 1
        L_valid = L_out - pk + 1
        m = acc[:, :, 0:L_valid]
        for t in range(1, pk):
            m = jnp.maximum(m, acc[:, :, t:t + L_valid])
        h = m[:, :, ::ps][:, :, :L_pool]
    h = h.reshape(h.shape[0], -1)
    for i in range(cfg["num_linear"]):
        w, b = params["lin"][i]
        h = h @ w.T + b[None, :]
        if cfg["activ"]:
            h = jnp.maximum(h, 0.0)
    return h


if __name__ == "__main__":
    # Small synthetic config consistent with the module's __init__.
    cfg = dict(
        num_cnn=2,
        seq_len=8,                                   # = in_channels of cnn0
        conv_io=[[8, 16, 3, 1], [16, 32, 3, 1]],     # [c_in, c_out, kernel, pad]
        pool=(2, 2, 0),                              # (kernel, stride, padding)
        num_linear=2,
        linear_io=[[128, 64], [64, 10]],             # flat_num = 32 * 4 = 128
        flat_num=128,
        activ=True,
        dropout=True,                                # identity at inference
    )

    key = jax.random.PRNGKey(0)
    keys = iter(jax.random.split(key, 16))

    params = {"cnn": [], "lin": []}
    for i in range(cfg["num_cnn"]):
        c_in, c_out, k, _ = cfg["conv_io"][i]
        w = 0.1 * jax.random.normal(next(keys), (c_out, c_in, k), jnp.float32)
        b = 0.1 * jax.random.normal(next(keys), (c_out,), jnp.float32)
        params["cnn"].append((w, b))
    for i in range(cfg["num_linear"]):
        f_in, f_out = cfg["linear_io"][i]
        w = 0.1 * jax.random.normal(next(keys), (f_out, f_in), jnp.float32)
        b = 0.1 * jax.random.normal(next(keys), (f_out,), jnp.float32)
        params["lin"].append((w, b))

    # input_seqs: (B, seq_len, L) NCW
    x = jax.random.normal(next(keys), (2, cfg["seq_len"], 16), jnp.float32)

    out = classifier_cnn1d_forward(x, params, cfg)
    out = jax.block_until_ready(out)

    ref = jax.block_until_ready(ref_forward(x, params, cfg))
    assert out.shape == (2, 10), out.shape
    assert jnp.allclose(out, ref, rtol=1e-4, atol=1e-4), \
        f"max abs err {jnp.max(jnp.abs(out - ref))}"

    print("KERNEL_OK")
</pallas_src>

<mosaic_0001>
module attributes {stable_mosaic.version = 11 : i64} {
  func.func @kernel(%arg0: i32, %arg1: memref<1x8x16xf32, #tpu.memory_space<vmem>>, %arg2: memref<16x24xf32, #tpu.memory_space<vmem>>, %arg3: memref<16x1xf32, #tpu.memory_space<vmem>>, %arg4: memref<15x8xf32, #tpu.memory_space<vmem>>, %arg5: memref<32x48xf32, #tpu.memory_space<vmem>>, %arg6: memref<32x1xf32, #tpu.memory_space<vmem>>, %arg7: memref<7x4xf32, #tpu.memory_space<vmem>>, %arg8: memref<128x64xf32, #tpu.memory_space<vmem>>, %arg9: memref<1x64xf32, #tpu.memory_space<vmem>>, %arg10: memref<64x10xf32, #tpu.memory_space<vmem>>, %arg11: memref<1x10xf32, #tpu.memory_space<vmem>>, %arg12: memref<1x1x10xf32, #tpu.memory_space<vmem>>) attributes {dimension_semantics = [#tpu.dimension_semantics<parallel>], iteration_bounds = array<i64: 2>, scalar_prefetch = 0 : i64, scratch_operands = 0 : i64, tpu.core_type = #tpu.core_type<tc>, window_params = [{transform_indices = @transform_0, window_bounds = array<i64: 1, 8, 16>}, {pipeline_mode = #tpu.pipeline_mode<synchronous>, transform_indices = @transform_1, window_bounds = array<i64: 16, 24>}, {pipeline_mode = #tpu.pipeline_mode<synchronous>, transform_indices = @transform_2, window_bounds = array<i64: 16, 1>}, {pipeline_mode = #tpu.pipeline_mode<synchronous>, transform_indices = @transform_3, window_bounds = array<i64: 15, 8>}, {pipeline_mode = #tpu.pipeline_mode<synchronous>, transform_indices = @transform_4, window_bounds = array<i64: 32, 48>}, {pipeline_mode = #tpu.pipeline_mode<synchronous>, transform_indices = @transform_5, window_bounds = array<i64: 32, 1>}, {pipeline_mode = #tpu.pipeline_mode<synchronous>, transform_indices = @transform_6, window_bounds = array<i64: 7, 4>}, {pipeline_mode = #tpu.pipeline_mode<synchronous>, transform_indices = @transform_7, window_bounds = array<i64: 128, 64>}, {pipeline_mode = #tpu.pipeline_mode<synchronous>, transform_indices = @transform_8, window_bounds = array<i64: 1, 64>}, {pipeline_mode = #tpu.pipeline_mode<synchronous>, transform_indices = @transform_9, window_bounds = array<i64: 64, 10>}, {pipeline_mode = #tpu.pipeline_mode<synchronous>, transform_indices = @transform_10, window_bounds = array<i64: 1, 10>}, {transform_indices = @transform_11, window_bounds = array<i64: 1, 1, 10>}]} {
    %c0 = arith.constant 0 : index
    %c0_0 = arith.constant 0 : index
    %c0_1 = arith.constant 0 : index
    %0 = vector.load %arg1[%c0, %c0_0, %c0_1] : memref<1x8x16xf32, #tpu.memory_space<vmem>>, vector<1x8x16xf32>
    %1 = vector.shape_cast %0 : vector<1x8x16xf32> to vector<8x16xf32>
    %cst = arith.constant 0.000000e+00 : f32
    %2 = vector.broadcast %cst : f32 to vector<8x1xf32>
    %3 = tpu.concatenate %2, %1, %2 in 1 : vector<8x1xf32>, vector<8x16xf32>, vector<8x1xf32> -> vector<8x18xf32>
    %4 = vector.extract_strided_slice %3 {offsets = [0, 0], sizes = [8, 16], strides = [1, 1]} : vector<8x18xf32> to vector<8x16xf32>
    %5 = vector.extract_strided_slice %3 {offsets = [0, 1], sizes = [8, 16], strides = [1, 1]} : vector<8x18xf32> to vector<8x16xf32>
    %6 = vector.extract_strided_slice %3 {offsets = [0, 2], sizes = [8, 16], strides = [1, 1]} : vector<8x18xf32> to vector<8x16xf32>
    %7 = tpu.concatenate %4, %5, %6 in 0 : vector<8x16xf32>, vector<8x16xf32>, vector<8x16xf32> -> vector<24x16xf32>
    %c0_2 = arith.constant 0 : index
    %c0_3 = arith.constant 0 : index
    %8 = vector.load %arg2[%c0_2, %c0_3] : memref<16x24xf32, #tpu.memory_space<vmem>>, vector<16x24xf32>
    %cst_4 = arith.constant dense<0.000000e+00> : vector<16x16xf32>
    %9 = tpu.matmul %8, %7, %cst_4 {dimension_numbers = #tpu.dot_dimension_numbers<[1], [0], [0], [1], [0, 0, 1, 1], [], []>} : vector<16x24xf32>, vector<24x16xf32>, vector<16x16xf32> -> vector<16x16xf32>
    %c0_5 = arith.constant 0 : index
    %c0_6 = arith.constant 0 : index
    %10 = vector.load %arg3[%c0_5, %c0_6] : memref<16x1xf32, #tpu.memory_space<vmem>>, vector<16x1xf32>
    %11 = vector.broadcast %10 : vector<16x1xf32> to vector<16x16xf32>
    %12 = arith.addf %9, %11 : vector<16x16xf32>
    %cst_7 = arith.constant 0.000000e+00 : f32
    %13 = vector.broadcast %cst_7 : f32 to vector<16x16xf32>
    %14 = arith.maximumf %12, %13 : vector<16x16xf32>
    %15 = vector.extract_strided_slice %14 {offsets = [0, 0], sizes = [16, 15], strides = [1, 1]} : vector<16x16xf32> to vector<16x15xf32>
    %16 = vector.extract_strided_slice %14 {offsets = [0, 1], sizes = [16, 15], strides = [1, 1]} : vector<16x16xf32> to vector<16x15xf32>
    %17 = arith.maximumf %15, %16 : vector<16x15xf32>
    %c0_8 = arith.constant 0 : index
    %c0_9 = arith.constant 0 : index
    %18 = vector.load %arg4[%c0_8, %c0_9] : memref<15x8xf32, #tpu.memory_space<vmem>>, vector<15x8xf32>
    %cst_10 = arith.constant dense<0.000000e+00> : vector<16x8xf32>
    %19 = tpu.matmul %17, %18, %cst_10 {dimension_numbers = #tpu.dot_dimension_numbers<[1], [0], [0], [1], [0, 0, 1, 1], [], []>} : vector<16x15xf32>, vector<15x8xf32>, vector<16x8xf32> -> vector<16x8xf32>
    %cst_11 = arith.constant 0.000000e+00 : f32
    %20 = vector.broadcast %cst_11 : f32 to vector<16x1xf32>
    %21 = tpu.concatenate %20, %19, %20 in 1 : vector<16x1xf32>, vector<16x8xf32>, vector<16x1xf32> -> vector<16x10xf32>
    %22 = vector.extract_strided_slice %21 {offsets = [0, 0], sizes = [16, 8], strides = [1, 1]} : vector<16x10xf32> to vector<16x8xf32>
    %23 = vector.extract_strided_slice %21 {offsets = [0, 1], sizes = [16, 8], strides = [1, 1]} : vector<16x10xf32> to vector<16x8xf32>
    %24 = vector.extract_strided_slice %21 {offsets = [0, 2], sizes = [16, 8], strides = [1, 1]} : vector<16x10xf32> to vector<16x8xf32>
    %25 = tpu.concatenate %22, %23, %24 in 0 : vector<16x8xf32>, vector<16x8xf32>, vector<16x8xf32> -> vector<48x8xf32>
    %c0_12 = arith.constant 0 : index
    %c0_13 = arith.constant 0 : index
    %26 = vector.load %arg5[%c0_12, %c0_13] : memref<32x48xf32, #tpu.memory_space<vmem>>, vector<32x48xf32>
    %cst_14 = arith.constant dense<0.000000e+00> : vector<32x8xf32>
    %27 = tpu.matmul %26, %25, %cst_14 {dimension_numbers = #tpu.dot_dimension_numbers<[1], [0], [0], [1], [0, 0, 1, 1], [], []>} : vector<32x48xf32>, vector<48x8xf32>, vector<32x8xf32> -> vector<32x8xf32>
    %c0_15 = arith.constant 0 : index
    %c0_16 = arith.constant 0 : index
    %28 = vector.load %arg6[%c0_15, %c0_16] : memref<32x1xf32, #tpu.memory_space<vmem>>, vector<32x1xf32>
    %29 = vector.broadcast %28 : vector<32x1xf32> to vector<32x8xf32>
    %30 = arith.addf %27, %29 : vector<32x8xf32>
    %cst_17 = arith.constant 0.000000e+00 : f32
    %31 = vector.broadcast %cst_17 : f32 to vector<32x8xf32>
    %32 = arith.maximumf %30, %31 : vector<32x8xf32>
    %33 = vector.extract_strided_slice %32 {offsets = [0, 0], sizes = [32, 7], strides = [1, 1]} : vector<32x8xf32> to vector<32x7xf32>
    %34 = vector.extract_strided_slice %32 {offsets = [0, 1], sizes = [32, 7], strides = [1, 1]} : vector<32x8xf32> to vector<32x7xf32>
    %35 = arith.maximumf %33, %34 : vector<32x7xf32>
    %c0_18 = arith.constant 0 : index
    %c0_19 = arith.constant 0 : index
    %36 = vector.load %arg7[%c0_18, %c0_19] : memref<7x4xf32, #tpu.memory_space<vmem>>, vector<7x4xf32>
    %cst_20 = arith.constant dense<0.000000e+00> : vector<32x4xf32>
    %37 = tpu.matmul %35, %36, %cst_20 {dimension_numbers = #tpu.dot_dimension_numbers<[1], [0], [0], [1], [0, 0, 1, 1], [], []>} : vector<32x7xf32>, vector<7x4xf32>, vector<32x4xf32> -> vector<32x4xf32>
    %38 = vector.extract_strided_slice %37 {offsets = [0, 0], sizes = [32, 1], strides = [1, 1]} : vector<32x4xf32> to vector<32x1xf32>
    %39 = vector.extract_strided_slice %37 {offsets = [0, 1], sizes = [32, 1], strides = [1, 1]} : vector<32x4xf32> to vector<32x1xf32>
    %40 = vector.extract_strided_slice %37 {offsets = [0, 2], sizes = [32, 1], strides = [1, 1]} : vector<32x4xf32> to vector<32x1xf32>
    %41 = vector.extract_strided_slice %37 {offsets = [0, 3], sizes = [32, 1], strides = [1, 1]} : vector<32x4xf32> to vector<32x1xf32>
    %42 = tpu.concatenate %38, %39, %40, %41 in 0 : vector<32x1xf32>, vector<32x1xf32>, vector<32x1xf32>, vector<32x1xf32> -> vector<128x1xf32>
    %43 = tpu.transpose %42, [1, 0] : vector<128x1xf32> -> vector<1x128xf32>
    %c0_21 = arith.constant 0 : index
    %c0_22 = arith.constant 0 : index
    %44 = vector.load %arg8[%c0_21, %c0_22] : memref<128x64xf32, #tpu.memory_space<vmem>>, vector<128x64xf32>
    %cst_23 = arith.constant dense<0.000000e+00> : vector<1x64xf32>
    %45 = tpu.matmul %43, %44, %cst_23 {dimension_numbers = #tpu.dot_dimension_numbers<[1], [0], [0], [1], [0, 0, 1, 1], [], []>} : vector<1x128xf32>, vector<128x64xf32>, vector<1x64xf32> -> vector<1x64xf32>
    %c0_24 = arith.constant 0 : index
    %c0_25 = arith.constant 0 : index
    %46 = vector.load %arg9[%c0_24, %c0_25] : memref<1x64xf32, #tpu.memory_space<vmem>>, vector<1x64xf32>
    %47 = arith.addf %45, %46 : vector<1x64xf32>
    %cst_26 = arith.constant 0.000000e+00 : f32
    %48 = vector.broadcast %cst_26 : f32 to vector<1x64xf32>
    %49 = arith.maximumf %47, %48 : vector<1x64xf32>
    %c0_27 = arith.constant 0 : index
    %c0_28 = arith.constant 0 : index
    %50 = vector.load %arg10[%c0_27, %c0_28] : memref<64x10xf32, #tpu.memory_space<vmem>>, vector<64x10xf32>
    %cst_29 = arith.constant dense<0.000000e+00> : vector<1x10xf32>
    %51 = tpu.matmul %49, %50, %cst_29 {dimension_numbers = #tpu.dot_dimension_numbers<[1], [0], [0], [1], [0, 0, 1, 1], [], []>} : vector<1x64xf32>, vector<64x10xf32>, vector<1x10xf32> -> vector<1x10xf32>
    %c0_30 = arith.constant 0 : index
    %c0_31 = arith.constant 0 : index
    %52 = vector.load %arg11[%c0_30, %c0_31] : memref<1x10xf32, #tpu.memory_space<vmem>>, vector<1x10xf32>
    %53 = arith.addf %51, %52 : vector<1x10xf32>
    %cst_32 = arith.constant 0.000000e+00 : f32
    %54 = vector.broadcast %cst_32 : f32 to vector<1x10xf32>
    %55 = arith.maximumf %53, %54 : vector<1x10xf32>
    %c0_33 = arith.constant 0 : index
    %c0_34 = arith.constant 0 : index
    %c0_35 = arith.constant 0 : index
    %56 = vector.load %arg12[%c0_33, %c0_34, %c0_35] : memref<1x1x10xf32, #tpu.memory_space<vmem>>, vector<1x1x10xf32>
    %57 = vector.shape_cast %56 : vector<1x1x10xf32> to vector<1x10xf32>
    %58 = vector.shape_cast %55 : vector<1x10xf32> to vector<1x1x10xf32>
    tpu.vector_store %arg12[%c0_33, %c0_34, %c0_35], %58 {strides = array<i32>} : memref<1x1x10xf32, #tpu.memory_space<vmem>>, vector<1x1x10xf32>,
    return
  }
  func.func @transform_0(%arg0: i32) -> (i32, i32, i32) {
    %c0_i32 = arith.constant 0 : i32
    %c0_i32_0 = arith.constant 0 : i32
    %c0_i32_1 = arith.constant 0 : i32
    return %arg0, %c0_i32, %c0_i32_0 : i32, i32, i32
  }
  func.func @transform_1(%arg0: i32) -> (i32, i32) {
    %c0_i32 = arith.constant 0 : i32
    %c0_i32_0 = arith.constant 0 : i32
    %c0_i32_1 = arith.constant 0 : i32
    return %c0_i32, %c0_i32_0 : i32, i32
  }
  func.func @transform_2(%arg0: i32) -> (i32, i32) {
    %c0_i32 = arith.constant 0 : i32
    %c0_i32_0 = arith.constant 0 : i32
    %c0_i32_1 = arith.constant 0 : i32
    return %c0_i32, %c0_i32_0 : i32, i32
  }
  func.func @transform_3(%arg0: i32) -> (i32, i32) {
    %c0_i32 = arith.constant 0 : i32
    %c0_i32_0 = arith.constant 0 : i32
    %c0_i32_1 = arith.constant 0 : i32
    return %c0_i32, %c0_i32_0 : i32, i32
  }
  func.func @transform_4(%arg0: i32) -> (i32, i32) {
    %c0_i32 = arith.constant 0 : i32
    %c0_i32_0 = arith.constant 0 : i32
    %c0_i32_1 = arith.constant 0 : i32
    return %c0_i32, %c0_i32_0 : i32, i32
  }
  func.func @transform_5(%arg0: i32) -> (i32, i32) {
    %c0_i32 = arith.constant 0 : i32
    %c0_i32_0 = arith.constant 0 : i32
    %c0_i32_1 = arith.constant 0 : i32
    return %c0_i32, %c0_i32_0 : i32, i32
  }
  func.func @transform_6(%arg0: i32) -> (i32, i32) {
    %c0_i32 = arith.constant 0 : i32
    %c0_i32_0 = arith.constant 0 : i32
    %c0_i32_1 = arith.constant 0 : i32
    return %c0_i32, %c0_i32_0 : i32, i32
  }
  func.func @transform_7(%arg0: i32) -> (i32, i32) {
    %c0_i32 = arith.constant 0 : i32
    %c0_i32_0 = arith.constant 0 : i32
    %c0_i32_1 = arith.constant 0 : i32
    return %c0_i32, %c0_i32_0 : i32, i32
  }
  func.func @transform_8(%arg0: i32) -> (i32, i32) {
    %c0_i32 = arith.constant 0 : i32
    %c0_i32_0 = arith.constant 0 : i32
    %c0_i32_1 = arith.constant 0 : i32
    return %c0_i32, %c0_i32_0 : i32, i32
  }
  func.func @transform_9(%arg0: i32) -> (i32, i32) {
    %c0_i32 = arith.constant 0 : i32
    %c0_i32_0 = arith.constant 0 : i32
    %c0_i32_1 = arith.constant 0 : i32
    return %c0_i32, %c0_i32_0 : i32, i32
  }
  func.func @transform_10(%arg0: i32) -> (i32, i32) {
    %c0_i32 = arith.constant 0 : i32
    %c0_i32_0 = arith.constant 0 : i32
    %c0_i32_1 = arith.constant 0 : i32
    return %c0_i32, %c0_i32_0 : i32, i32
  }
  func.func @transform_11(%arg0: i32) -> (i32, i32, i32) {
    %c0_i32 = arith.constant 0 : i32
    %c0_i32_0 = arith.constant 0 : i32
    %c0_i32_1 = arith.constant 0 : i32
    return %arg0, %c0_i32, %c0_i32_0 : i32, i32, i32
  }
}

</mosaic_0001>

<llo_original>
// kernel: tpu_custom_call.1
$region0: #{tpu_custom_call.1}
  #allocation0 [shape = 'u32[]', space=smem, size = 0x4, offset = 0x4, fixed_abs, tag = 'smem constant byte address 0x4 - core index']
  #allocation1 [shape = 'u32[144,128]{1,0:T(1,128)}', space=vmem, size = 0x12000, scoped, tag = 'internal scratch']
  %s0 = inlined_call_operand.vmem [shape: f32[2,8,16], index: 0, kind: input, shape index: {}]
  %s1 = inlined_call_operand.vmem [shape: f32[16,24], index: 1, kind: input, shape index: {}]
  %s2 = inlined_call_operand.vmem [shape: f32[16,1], index: 2, kind: input, shape index: {}]
  %s3 = inlined_call_operand.vmem [shape: f32[15,8], index: 3, kind: input, shape index: {}]
  %s4 = inlined_call_operand.vmem [shape: f32[32,48], index: 4, kind: input, shape index: {}]
  %s5 = inlined_call_operand.vmem [shape: f32[32,1], index: 5, kind: input, shape index: {}]
  %s6 = inlined_call_operand.vmem [shape: f32[7,4], index: 6, kind: input, shape index: {}]
  %s7 = inlined_call_operand.vmem [shape: f32[128,64], index: 7, kind: input, shape index: {}]
  %s8 = inlined_call_operand.vmem [shape: f32[1,64], index: 8, kind: input, shape index: {}]
  %s9 = inlined_call_operand.vmem [shape: f32[64,10], index: 9, kind: input, shape index: {}]
  %s10 = inlined_call_operand.vmem [shape: f32[1,10], index: 10, kind: input, shape index: {}]
  %s11 = inlined_call_operand.hbm [shape: f32[2,1,10], index: 11, kind: output, shape index: {}]
  %s12 = sld [smem:[#allocation0]]
  $region77: #{tpu_custom_call.1} parent=0
    _
  %s14 = ssub.s32 1, %s12
  %s15 = scalar_select 0, %s14, %s12
  $region1: #{tpu_custom_call.1} parent=0
    #allocation2 [shape = 'u8[1024]{0}', space=vmem, size = 0x400, scoped, tag = 'output window, operand 0']
    #allocation3 [shape = 's32[2]{0}', space=sflag, size = 0x8, scoped, tag = 'scoped memory for tpu_custom_call.1']
    %16 = vsyncpa [#allocation3], 0
    %s17 = scalar_lea.sflag [#allocation3], 1
    %18 = vsyncpa %s17, 0
    loop: start=0, step=1, limit=4
    $region2: #{tpu_custom_call.1} parent=1 // loop_pre_header
      _
    $region3: #{tpu_custom_call.1} parent=1 // loop_header
      %s20 = sphi 0, %s24
      %p21 = scmp.ge.s32.totalorder %s20, 4
      %s30 = sphi 0, %s32
      %s33 = sphi 0, %s30
      %s34 = sphi 0, %s33
      %s50 = sphi 0, %s34
      %s54 = sphi 0, %s54
      %s56 = sphi 0, %s54
      %s57 = sphi 0, %s56
      %s71 = sphi 0, %s57
      %s75 = sphi 0, %s75
      %s77 = sphi 0, %s75
      %s78 = sphi 0, %s77
      %s92 = sphi 0, %s78
      %s96 = sphi 0, %s96
      %s98 = sphi 0, %s96
      %s99 = sphi 0, %s98
      %s113 = sphi 0, %s99
      %s117 = sphi 0, %s117
      %s119 = sphi 0, %s117
      %s120 = sphi 0, %s119
      %s134 = sphi 0, %s120
      %s138 = sphi 0, %s138
      %s140 = sphi 0, %s138
      %s141 = sphi 0, %s140
      %s155 = sphi 0, %s141
      %s159 = sphi 0, %s159
      %s161 = sphi 0, %s159
      %s162 = sphi 0, %s161
      %s176 = sphi 0, %s162
      %s180 = sphi 0, %s180
      %s182 = sphi 0, %s180
      %s183 = sphi 0, %s182
      %s197 = sphi 0, %s183
      %s201 = sphi 0, %s201
      %s203 = sphi 0, %s201
      %s204 = sphi 0, %s203
      %s218 = sphi 0, %s204
      %s222 = sphi 0, %s222
      %s224 = sphi 0, %s222
      %s225 = sphi 0, %s224
      %s239 = sphi 0, %s225
      %s243 = sphi 0, %s243
      %s245 = sphi 0, %s243
      %s246 = sphi 0, %s245
      %s260 = sphi 0, %s246
      %s266 = sphi 0, %s268
      %s269 = sphi 0, %s266
      %s270 = sphi 0, %s269
      %s286 = sphi 0, %s270
    $region4: #{tpu_custom_call.1} parent=1 // loop_header_branch
      %23 = sbr.rel (%p21) target = $region8
    $region5: #{tpu_custom_call.1} parent=1 // loop_body
      %s25 = ssub.s32 %s20, 1
      %s26 = ssub.s32 %s20, 2
      %s27 = sadd.s32 %s20, 1
      %s28 = ssub.s32 %s20, %s27
      %p29 = scmp.eq.s32.totalorder %s28, 0
      %s31 = sadd.s32 %s30, 1
      %s32 = scalar_select %p29, %s30, %s31
      %p35 = pneg %p29
      %p36 = scmp.eq.s32.totalorder %s20, 1
      %p37 = por %p35, %p36
      %p38 = scmp.ne.s32.totalorder %s30, %s33
      %p39 = scmp.eq.s32.totalorder %s20, 0
      %p40 = por %p38, %p39
      %p41 = scmp.ne.s32.totalorder %s30, %s33
      %p42 = scmp.eq.s32.totalorder %s25, 1
      %p43 = por %p41, %p42
      %p44 = scmp.ne.s32.totalorder %s33, %s34
      %p45 = scmp.eq.s32.totalorder %s25, 0
      %p46 = por %p44, %p45
      %p47 = scmp.ne.s32.totalorder %s33, %s34
      %p48 = scmp.eq.s32.totalorder %s26, 1
      %p49 = por %p47, %p48
      %p51 = scmp.ne.s32.totalorder %s34, %s50
      %p52 = scmp.eq.s32.totalorder %s26, 0
      %p53 = por %p51, %p52
      %s55 = sadd.s32 %s54, 1
      %p58 = scmp.eq.s32.totalorder %s20, 1
      %p59 = scmp.ne.s32.totalorder %s54, %s56
      %p60 = scmp.eq.s32.totalorder %s20, 0
      %p61 = por %p59, %p60
      %p62 = scmp.ne.s32.totalorder %s54, %s56
      %p63 = scmp.eq.s32.totalorder %s25, 1
      %p64 = por %p62, %p63
      %p65 = scmp.ne.s32.totalorder %s56, %s57
      %p66 = scmp.eq.s32.totalorder %s25, 0
      %p67 = por %p65, %p66
      %p68 = scmp.ne.s32.totalorder %s56, %s57
      %p69 = scmp.eq.s32.totalorder %s26, 1
      %p70 = por %p68, %p69
      %p72 = scmp.ne.s32.totalorder %s57, %s71
      %p73 = scmp.eq.s32.totalorder %s26, 0
      %p74 = por %p72, %p73
      %s76 = sadd.s32 %s75, 1
      %p79 = scmp.eq.s32.totalorder %s20, 1
      %p80 = scmp.ne.s32.totalorder %s75, %s77
      %p81 = scmp.eq.s32.totalorder %s20, 0
      %p82 = por %p80, %p81
      %p83 = scmp.ne.s32.totalorder %s75, %s77
      %p84 = scmp.eq.s32.totalorder %s25, 1
      %p85 = por %p83, %p84
      %p86 = scmp.ne.s32.totalorder %s77, %s78
      %p87 = scmp.eq.s32.totalorder %s25, 0
      %p88 = por %p86, %p87
      %p89 = scmp.ne.s32.totalorder %s77, %s78
      %p90 = scmp.eq.s32.totalorder %s26, 1
      %p91 = por %p89, %p90
      %p93 = scmp.ne.s32.totalorder %s78, %s92
      %p94 = scmp.eq.s32.totalorder %s26, 0
      %p95 = por %p93, %p94
      %s97 = sadd.s32 %s96, 1
      %p100 = scmp.eq.s32.totalorder %s20, 1
      %p101 = scmp.ne.s32.totalorder %s96, %s98
      %p102 = scmp.eq.s32.totalorder %s20, 0
      %p103 = por %p101, %p102
      %p104 = scmp.ne.s32.totalorder %s96, %s98
      %p105 = scmp.eq.s32.totalorder %s25, 1
      %p106 = por %p104, %p105
      %p107 = scmp.ne.s32.totalorder %s98, %s99
      %p108 = scmp.eq.s32.totalorder %s25, 0
      %p109 = por %p107, %p108
      %p110 = scmp.ne.s32.totalorder %s98, %s99
      %p111 = scmp.eq.s32.totalorder %s26, 1
      %p112 = por %p110, %p111
      %p114 = scmp.ne.s32.totalorder %s99, %s113
      %p115 = scmp.eq.s32.totalorder %s26, 0
      %p116 = por %p114, %p115
      %s118 = sadd.s32 %s117, 1
      %p121 = scmp.eq.s32.totalorder %s20, 1
      %p122 = scmp.ne.s32.totalorder %s117, %s119
      %p123 = scmp.eq.s32.totalorder %s20, 0
      %p124 = por %p122, %p123
      %p125 = scmp.ne.s32.totalorder %s117, %s119
      %p126 = scmp.eq.s32.totalorder %s25, 1
      %p127 = por %p125, %p126
      %p128 = scmp.ne.s32.totalorder %s119, %s120
      %p129 = scmp.eq.s32.totalorder %s25, 0
      %p130 = por %p128, %p129
      %p131 = scmp.ne.s32.totalorder %s119, %s120
      %p132 = scmp.eq.s32.totalorder %s26, 1
      %p133 = por %p131, %p132
      %p135 = scmp.ne.s32.totalorder %s120, %s134
      %p136 = scmp.eq.s32.totalorder %s26, 0
      %p137 = por %p135, %p136
      %s139 = sadd.s32 %s138, 1
      %p142 = scmp.eq.s32.totalorder %s20, 1
      %p143 = scmp.ne.s32.totalorder %s138, %s140
      %p144 = scmp.eq.s32.totalorder %s20, 0
      %p145 = por %p143, %p144
      %p146 = scmp.ne.s32.totalorder %s138, %s140
      %p147 = scmp.eq.s32.totalorder %s25, 1
      %p148 = por %p146, %p147
      %p149 = scmp.ne.s32.totalorder %s140, %s141
      %p150 = scmp.eq.s32.totalorder %s25, 0
      %p151 = por %p149, %p150
      %p152 = scmp.ne.s32.totalorder %s140, %s141
      %p153 = scmp.eq.s32.totalorder %s26, 1
      %p154 = por %p152, %p153
      %p156 = scmp.ne.s32.totalorder %s141, %s155
      %p157 = scmp.eq.s32.totalorder %s26, 0
      %p158 = por %p156, %p157
      %s160 = sadd.s32 %s159, 1
      %p163 = scmp.eq.s32.totalorder %s20, 1
      %p164 = scmp.ne.s32.totalorder %s159, %s161
      %p165 = scmp.eq.s32.totalorder %s20, 0
      %p166 = por %p164, %p165
      %p167 = scmp.ne.s32.totalorder %s159, %s161
      %p168 = scmp.eq.s32.totalorder %s25, 1
      %p169 = por %p167, %p168
      %p170 = scmp.ne.s32.totalorder %s161, %s162
      %p171 = scmp.eq.s32.totalorder %s25, 0
      %p172 = por %p170, %p171
      %p173 = scmp.ne.s32.totalorder %s161, %s162
      %p174 = scmp.eq.s32.totalorder %s26, 1
      %p175 = por %p173, %p174
      %p177 = scmp.ne.s32.totalorder %s162, %s176
      %p178 = scmp.eq.s32.totalorder %s26, 0
      %p179 = por %p177, %p178
      %s181 = sadd.s32 %s180, 1
      %p184 = scmp.eq.s32.totalorder %s20, 1
      %p185 = scmp.ne.s32.totalorder %s180, %s182
      %p186 = scmp.eq.s32.totalorder %s20, 0
      %p187 = por %p185, %p186
      %p188 = scmp.ne.s32.totalorder %s180, %s182
      %p189 = scmp.eq.s32.totalorder %s25, 1
      %p190 = por %p188, %p189
      %p191 = scmp.ne.s32.totalorder %s182, %s183
      %p192 = scmp.eq.s32.totalorder %s25, 0
      %p193 = por %p191, %p192
      %p194 = scmp.ne.s32.totalorder %s182, %s183
      %p195 = scmp.eq.s32.totalorder %s26, 1
      %p196 = por %p194, %p195
      %p198 = scmp.ne.s32.totalorder %s183, %s197
      %p199 = scmp.eq.s32.totalorder %s26, 0
      %p200 = por %p198, %p199
      %s202 = sadd.s32 %s201, 1
      %p205 = scmp.eq.s32.totalorder %s20, 1
      %p206 = scmp.ne.s32.totalorder %s201, %s203
      %p207 = scmp.eq.s32.totalorder %s20, 0
      %p208 = por %p206, %p207
      %p209 = scmp.ne.s32.totalorder %s201, %s203
      %p210 = scmp.eq.s32.totalorder %s25, 1
      %p211 = por %p209, %p210
      %p212 = scmp.ne.s32.totalorder %s203, %s204
      %p213 = scmp.eq.s32.totalorder %s25, 0
      %p214 = por %p212, %p213
      %p215 = scmp.ne.s32.totalorder %s203, %s204
      %p216 = scmp.eq.s32.totalorder %s26, 1
      %p217 = por %p215, %p216
      %p219 = scmp.ne.s32.totalorder %s204, %s218
      %p220 = scmp.eq.s32.totalorder %s26, 0
      %p221 = por %p219, %p220
      %s223 = sadd.s32 %s222, 1
      %p226 = scmp.eq.s32.totalorder %s20, 1
      %p227 = scmp.ne.s32.totalorder %s222, %s224
      %p228 = scmp.eq.s32.totalorder %s20, 0
      %p229 = por %p227, %p228
      %p230 = scmp.ne.s32.totalorder %s222, %s224
      %p231 = scmp.eq.s32.totalorder %s25, 1
      %p232 = por %p230, %p231
      %p233 = scmp.ne.s32.totalorder %s224, %s225
      %p234 = scmp.eq.s32.totalorder %s25, 0
      %p235 = por %p233, %p234
      %p236 = scmp.ne.s32.totalorder %s224, %s225
      %p237 = scmp.eq.s32.totalorder %s26, 1
      %p238 = por %p236, %p237
      %p240 = scmp.ne.s32.totalorder %s225, %s239
      %p241 = scmp.eq.s32.totalorder %s26, 0
      %p242 = por %p240, %p241
      %s244 = sadd.s32 %s243, 1
      %p247 = scmp.eq.s32.totalorder %s20, 1
      %p248 = scmp.ne.s32.totalorder %s243, %s245
      %p249 = scmp.eq.s32.totalorder %s20, 0
      %p250 = por %p248, %p249
      %p251 = scmp.ne.s32.totalorder %s243, %s245
      %p252 = scmp.eq.s32.totalorder %s25, 1
      %p253 = por %p251, %p252
      %p254 = scmp.ne.s32.totalorder %s245, %s246
      %p255 = scmp.eq.s32.totalorder %s25, 0
      %p256 = por %p254, %p255
      %p257 = scmp.ne.s32.totalorder %s245, %s246
      %p258 = scmp.eq.s32.totalorder %s26, 1
      %p259 = por %p257, %p258
      %p261 = scmp.ne.s32.totalorder %s246, %s260
      %p262 = scmp.eq.s32.totalorder %s26, 0
      %p263 = por %p261, %p262
      %s264 = ssub.s32 %s20, %s27
      %p265 = scmp.eq.s32.totalorder %s264, 0
      %s267 = sadd.s32 %s266, 1
      %s268 = scalar_select %p265, %s266, %s267
      %p271 = pneg %p265
      %p272 = scmp.eq.s32.totalorder %s20, 1
      %p273 = por %p271, %p272
      %p274 = scmp.ne.s32.totalorder %s266, %s269
      %p275 = scmp.eq.s32.totalorder %s20, 0
      %p276 = por %p274, %p275
      %p277 = scmp.ne.s32.totalorder %s266, %s269
      %p278 = scmp.eq.s32.totalorder %s25, 1
      %p279 = por %p277, %p278
      %p280 = scmp.ne.s32.totalorder %s269, %s270
      %p281 = scmp.eq.s32.totalorder %s25, 0
      %p282 = por %p280, %p281
      %p283 = scmp.ne.s32.totalorder %s269, %s270
      %p284 = scmp.eq.s32.totalorder %s26, 1
      %p285 = por %p283, %p284
      %p287 = scmp.ne.s32.totalorder %s270, %s286
      %p288 = scmp.eq.s32.totalorder %s26, 0
      %p289 = por %p287, %p288
      %p290 = scmp.le.s32.totalorder 1, %s20
      %p291 = scmp.lt.s32.totalorder %s20, 3
      %p292 = pnand %p290, %p291
      %p293 = pneg %p292
      // Predicated region
      $region9: #{tpu_custom_call.1} parent=5 // pred_check
        _
      $region10: #{tpu_custom_call.1} parent=5 // pred_check_branch
        %295 = sbr.rel (%p292) target = $region12
      $region11: #{tpu_custom_call.1} parent=5 // pred_region
        %s296 = ssub.s32 %s20, 1
        // Predicated region
        $region13: #{tpu_custom_call.1} parent=11 // pred_check
          %p297 = pneg %p67
        $region14: #{tpu_custom_call.1} parent=11 // pred_check_branch
          %299 = sbr.rel (%p297) target = $region16
        $region15: #{tpu_custom_call.1} parent=11 // pred_region
          _
        $region16: #{tpu_custom_call.1} parent=11 // pred_fallthru
          _
        // Predicated region
        $region17: #{tpu_custom_call.1} parent=11 // pred_check
          %p300 = pneg %p88
        $region18: #{tpu_custom_call.1} parent=11 // pred_check_branch
          %302 = sbr.rel (%p300) target = $region20
        $region19: #{tpu_custom_call.1} parent=11 // pred_region
          _
        $region20: #{tpu_custom_call.1} parent=11 // pred_fallthru
          _
        // Predicated region
        $region21: #{tpu_custom_call.1} parent=11 // pred_check
          %p303 = pneg %p109
        $region22: #{tpu_custom_call.1} parent=11 // pred_check_branch
          %305 = sbr.rel (%p303) target = $region24
        $region23: #{tpu_custom_call.1} parent=11 // pred_region
          _
        $region24: #{tpu_custom_call.1} parent=11 // pred_fallthru
          _
        // Predicated region
        $region25: #{tpu_custom_call.1} parent=11 // pred_check
          %p306 = pneg %p130
        $region26: #{tpu_custom_call.1} parent=11 // pred_check_branch
          %308 = sbr.rel (%p306) target = $region28
        $region27: #{tpu_custom_call.1} parent=11 // pred_region
          _
        $region28: #{tpu_custom_call.1} parent=11 // pred_fallthru
          _
        // Predicated region
        $region29: #{tpu_custom_call.1} parent=11 // pred_check
          %p309 = pneg %p151
        $region30: #{tpu_custom_call.1} parent=11 // pred_check_branch
          %311 = sbr.rel (%p309) target = $region32
        $region31: #{tpu_custom_call.1} parent=11 // pred_region
          _
        $region32: #{tpu_custom_call.1} parent=11 // pred_fallthru
          _
        // Predicated region
        $region33: #{tpu_custom_call.1} parent=11 // pred_check
          %p312 = pneg %p172
        $region34: #{tpu_custom_call.1} parent=11 // pred_check_branch
          %314 = sbr.rel (%p312) target = $region36
        $region35: #{tpu_custom_call.1} parent=11 // pred_region
          _
        $region36: #{tpu_custom_call.1} parent=11 // pred_fallthru
          _
        // Predicated region
        $region37: #{tpu_custom_call.1} parent=11 // pred_check
          %p315 = pneg %p193
        $region38: #{tpu_custom_call.1} parent=11 // pred_check_branch
          %317 = sbr.rel (%p315) target = $region40
        $region39: #{tpu_custom_call.1} parent=11 // pred_region
          _
        $region40: #{tpu_custom_call.1} parent=11 // pred_fallthru
          _
        // Predicated region
        $region41: #{tpu_custom_call.1} parent=11 // pred_check
          %p318 = pneg %p214
        $region42: #{tpu_custom_call.1} parent=11 // pred_check_branch
          %320 = sbr.rel (%p318) target = $region44
        $region43: #{tpu_custom_call.1} parent=11 // pred_region
          _
        $region44: #{tpu_custom_call.1} parent=11 // pred_fallthru
          _
        // Predicated region
        $region45: #{tpu_custom_call.1} parent=11 // pred_check
          %p321 = pneg %p235
        $region46: #{tpu_custom_call.1} parent=11 // pred_check_branch
          %323 = sbr.rel (%p321) target = $region48
        $region47: #{tpu_custom_call.1} parent=11 // pred_region
          _
        $region48: #{tpu_custom_call.1} parent=11 // pred_fallthru
          _
        // Predicated region
        $region49: #{tpu_custom_call.1} parent=11 // pred_check
          %p324 = pneg %p256
        $region50: #{tpu_custom_call.1} parent=11 // pred_check_branch
          %326 = sbr.rel (%p324) target = $region52
        $region51: #{tpu_custom_call.1} parent=11 // pred_region
          _
        $region52: #{tpu_custom_call.1} parent=11 // pred_fallthru
          _
      $region12: #{tpu_custom_call.1} parent=5 // pred_fallthru
        _
      %p327 = scmp.lt.s32.totalorder %s20, 2
      // Predicated region
      $region53: #{tpu_custom_call.1} parent=5 // pred_check
        %p328 = pneg %p327
      $region54: #{tpu_custom_call.1} parent=5 // pred_check_branch
        %330 = sbr.rel (%p328) target = $region56
      $region55: #{tpu_custom_call.1} parent=5 // pred_region
        // Predicated region
        $region57: #{tpu_custom_call.1} parent=55 // pred_check
          %p331 = pneg %p40
        $region58: #{tpu_custom_call.1} parent=55 // pred_check_branch
          %333 = sbr.rel (%p331) target = $region60
        $region59: #{tpu_custom_call.1} parent=55 // pred_region
          %p334 = scmp.lt.s32.totalorder %s20, 1
          %s335 = scalar_select %p334, %s20, 1
          %s336 = smul.addr %s335, 8
          %s337 = scalar_lea.vmem %s0, %s336
        $region60: #{tpu_custom_call.1} parent=55 // pred_fallthru
          _
      $region56: #{tpu_custom_call.1} parent=5 // pred_fallthru
        _
      %p338 = scmp.le.s32.totalorder 1, %s20
      %p339 = scmp.lt.s32.totalorder %s20, 3
      %p340 = pnand %p338, %p339
      %p341 = pneg %p340
      // Predicated region
      $region61: #{tpu_custom_call.1} parent=5 // pred_check
        _
      $region62: #{tpu_custom_call.1} parent=5 // pred_check_branch
        %343 = sbr.rel (%p340) target = $region64
      $region63: #{tpu_custom_call.1} parent=5 // pred_region
        %s344 = ssub.s32 %s20, 1
        %p345 = scmp.lt.s32.totalorder %s25, 1
        %s346 = scalar_select %p345, %s25, 1
        %s347 = smul.addr %s346, 8
        %s348 = scalar_lea.vmem %s0, %s347
        %p349 = pneg %p46
        %p350 = pneg %p43
        %p351 = pneg %p67
        %p352 = pneg %p64
        %p353 = pneg %p88
        %p354 = pneg %p85
        %p355 = pneg %p109
        %p356 = pneg %p106
        %p357 = pneg %p130
        %p358 = pneg %p127
        %p359 = pneg %p151
        %p360 = pneg %p148
        %p361 = pneg %p172
        %p362 = pneg %p169
        %p363 = pneg %p193
        %p364 = pneg %p190
        %p365 = pneg %p214
        %p366 = pneg %p211
        %p367 = pneg %p235
        %p368 = pneg %p232
        %p369 = pneg %p256
        %p370 = pneg %p253
        %p371 = pneg %p282
        %p372 = pneg %p279
        %s373 = sand.u32 %s269, 1
        %s374 = scalar_lea.sflag [#allocation3], %s373
        %s375 = sand.u32 %s269, 1
        %s376 = scalar_lea.vmem [#allocation2], %s375
        %p377 = scmp.lt.s32.totalorder %s25, 1
        %s378 = scalar_select %p377, %s25, 1
        %s379 = smul.addr %s378, 8
        %s380 = scalar_lea.vmem %s0, %s379
        %v381 = vld [vmem:[%s380] sm:$0xff]
        %383 = vrot.lane.b32.xlu0 %v381, 1
        %v384 = vpop.permute.xlu0 %383
        %vm386 = vcmask 7168
        %v387 = vsel %vm386, 0.0, %v384
        %vm388 = vcmask 138240
        %v389 = vsel %vm388, %v387, 0.0
        %391 = vrot.lane.b32.xlu0 %v389, 127
        %v392 = vpop.permute.xlu0 %391
        %394 = vrot.lane.b32.xlu0 %v389, 126
        %v395 = vpop.permute.xlu0 %394
        %v397 = vld [vmem:[%s1] sm:$0xff]
        %v398 = vld [vmem:[%s1 + $0x8] sm:$0xff]
        %v399 = vld [vmem:[%s2] sm:$0xff]
        %v400 = vld [vmem:[%s2 + $0x8] sm:$0xff]
        %402 = vset.pattern.permute.xlu0 0
        %403 = vperm.xlu0 %402, %v399
        %v404 = vpop.permute.xlu0 %403
        %407 = vset.pattern.permute.xlu0 0
        %408 = vperm.xlu0 %407, %v400
        %v409 = vpop.permute.xlu0 %408
        %vm411 = vcmask 195584
        %v413 = vsel %vm411, %v397, 0
        %v416 = vsel %vm411, %v398, 0
        %418 = vmatprep.subr.mxu0 0.0
        %419 = vmatpush1.msra.mxu0 %v389
        %420 = vmatprep.subr.mxu0 0.0
        %421 = vmatpush1.msra.mxu0 %v392
        %422 = vmatprep.subr.mxu0 0.0
        %423 = vmatpush1.msra.mxu0 %v395
        %424 = vmatprep.subr.mxu0 0.0
        %425 = vmatpush1.msra.mxu0 0.0
        %426 = vmatprep.subr.mxu0 0.0
        %427 = vmatpush1.msra.mxu0 0.0
        %428 = vmatprep.subr.mxu0 0.0
        %429 = vmatpush1.msra.mxu0 0.0
        %430 = vmatprep.subr.mxu0 0.0
        %431 = vmatpush1.msra.mxu0 0.0
        %432 = vmatprep.subr.mxu0 0.0
        %433 = vmatpush1.msra.mxu0 0.0
        %434 = vmatprep.subr.mxu0 0.0
        %435 = vmatpush1.msra.mxu0 0.0
        %436 = vmatprep.subr.mxu0 0.0
        %437 = vmatpush1.msra.mxu0 0.0
        %438 = vmatprep.subr.mxu0 0.0
        %439 = vmatpush1.msra.mxu0 0.0
        %440 = vmatprep.subr.mxu0 0.0
        %441 = vmatpush1.msra.mxu0 0.0
        %442 = vmatprep.subr.mxu0 0.0
        %443 = vmatpush1.msra.mxu0 0.0
        %444 = vmatprep.subr.mxu0 0.0
        %445 = vmatpush1.msra.mxu0 0.0
        %446 = vmatprep.subr.mxu0 0.0
        %447 = vmatpush1.msra.mxu0 0.0
        %448 = vmatprep.subr.mxu0 0.0
        %449 = vmatpush1.msra.mxu0 0.0
        %450 = vmatprep.subr.mxu0 0.0
        %451 = vmatpush1.msra.mxu0 0.0
        %452 = vmatprep.subr.mxu0 0.0
        %453 = vmatpush1.msra.mxu0 0.0
        %454 = vmatprep.subr.mxu0 0.0
        %455 = vmatpush1.msra.mxu0 0.0
        %456 = vmatprep.subr.mxu0 0.0
        %457 = vmatpush1.msra.mxu0 0.0
        %458 = vmatprep.subr.mxu0 0.0
        %459 = vmatpush1.msra.mxu0 0.0
        %460 = vmatprep.subr.mxu0 0.0
        %461 = vmatpush1.msra.mxu0 0.0
        %462 = vmatprep.subr.mxu0 0.0
        %463 = vmatpush1.msra.mxu0 0.0
        %464 = vmatprep.subr.mxu0 0.0
        %465 = vmatpush1.msra.mxu0 0.0
        %466 = vmatprep.subr.mxu0 0.0
        %467 = vmatpush1.msra.mxu0 0.0
        %468 = vmatprep.subr.mxu0 0.0
        %469 = vmatpush1.msra.mxu0 0.0
        %470 = vmatprep.subr.mxu0 0.0
        %471 = vmatpush1.msra.mxu0 0.0
        %472 = vmatprep.subr.mxu0 0.0
        %473 = vmatpush1.msra.mxu0 0.0
        %474 = vmatprep.subr.mxu0 0.0
        %475 = vmatpush1.msra.mxu0 0.0
        %476 = vmatprep.subr.mxu0 0.0
        %477 = vmatpush1.msra.mxu0 0.0
        %478 = vmatprep.subr.mxu0 0.0
        %479 = vmatpush1.msra.mxu0 0.0
        %480 = vmatprep.subr.mxu0 0.0
        %481 = vmatpush1.msra.mxu0 0.0
        %482 = vmatprep.mubr.f32.mxu0 0.0
        %483 = vmatmul.mubr.f32.gmra.mrb[0].mxu0 %v413
        %v484 = vpop.f32.mrb[0].mxu0
        %v485 = vadd.f32 %v404, %v484
        %v486 = vpop.f32.mrb[0].mxu0
        %487 = vmatprep.mubr.f32.mxu0 0.0
        %488 = vmatmul.mubr.f32.gmra.mrb[0].mxu0 %v416
        %v489 = vpop.f32.mrb[0].mxu0
        %v490 = vadd.f32 %v409, %v489
        %v491 = vpop.f32.mrb[0].mxu0
        %492 = vdwg.mxu0
        %v493 = vmax.f32 %v485, 0.0
        %v494 = vmax.f32 %v490, 0.0
        %497 = vrot.lane.b32.xlu0 %v493, 127
        %v498 = vpop.permute.xlu0 %497
        %499 = vrot.lane.b32.xlu0 %v494, 127
        %v500 = vpop.permute.xlu0 %499
        %v503 = vmax.f32 %v493, %v498
        %v504 = vmax.f32 %v494, %v500
        %v505 = vld [vmem:[%s3] sm:$0xff]
        %v506 = vld [vmem:[%s3 + $0x8] sm:$0x7f]
        %vm507 = vcmask 121856
        %v509 = vsel %vm507, %v503, 0
        %v512 = vsel %vm507, %v504, 0
        %vm514 = vcmask 1046528
        %v516 = vsel %vm514, %v506, 0
        %518 = vmatprep.subr.mxu0 0.0
        %519 = vmatpush1.msra.mxu0 %v505
        %520 = vmatprep.subr.mxu0 0.0
        %521 = vmatpush1.msra.mxu0 %v516
        %522 = vmatprep.subr.mxu0 0.0
        %523 = vmatpush1.msra.mxu0 0.0
        %524 = vmatprep.subr.mxu0 0.0
        %525 = vmatpush1.msra.mxu0 0.0
        %526 = vmatprep.subr.mxu0 0.0
        %527 = vmatpush1.msra.mxu0 0.0
        %528 = vmatprep.subr.mxu0 0.0
        %529 = vmatpush1.msra.mxu0 0.0
        %530 = vmatprep.subr.mxu0 0.0
        %531 = vmatpush1.msra.mxu0 0.0
        %532 = vmatprep.subr.mxu0 0.0
        %533 = vmatpush1.msra.mxu0 0.0
        %534 = vmatprep.subr.mxu0 0.0
        %535 = vmatpush1.msra.mxu0 0.0
        %536 = vmatprep.subr.mxu0 0.0
        %537 = vmatpush1.msra.mxu0 0.0
        %538 = vmatprep.subr.mxu0 0.0
        %539 = vmatpush1.msra.mxu0 0.0
        %540 = vmatprep.subr.mxu0 0.0
        %541 = vmatpush1.msra.mxu0 0.0
        %542 = vmatprep.subr.mxu0 0.0
        %543 = vmatpush1.msra.mxu0 0.0
        %544 = vmatprep.subr.mxu0 0.0
        %545 = vmatpush1.msra.mxu0 0.0
        %546 = vmatprep.subr.mxu0 0.0
        %547 = vmatpush1.msra.mxu0 0.0
        %548 = vmatprep.subr.mxu0 0.0
        %549 = vmatpush1.msra.mxu0 0.0
        %550 = vmatprep.subr.mxu0 0.0
        %551 = vmatpush1.msra.mxu0 0.0
        %552 = vmatprep.subr.mxu0 0.0
        %553 = vmatpush1.msra.mxu0 0.0
        %554 = vmatprep.subr.mxu0 0.0
        %555 = vmatpush1.msra.mxu0 0.0
        %556 = vmatprep.subr.mxu0 0.0
        %557 = vmatpush1.msra.mxu0 0.0
        %558 = vmatprep.subr.mxu0 0.0
        %559 = vmatpush1.msra.mxu0 0.0
        %560 = vmatprep.subr.mxu0 0.0
        %561 = vmatpush1.msra.mxu0 0.0
        %562 = vmatprep.subr.mxu0 0.0
        %563 = vmatpush1.msra.mxu0 0.0
        %564 = vmatprep.subr.mxu0 0.0
        %565 = vmatpush1.msra.mxu0 0.0
        %566 = vmatprep.subr.mxu0 0.0
        %567 = vmatpush1.msra.mxu0 0.0
        %568 = vmatprep.subr.mxu0 0.0
        %569 = vmatpush1.msra.mxu0 0.0
        %570 = vmatprep.subr.mxu0 0.0
        %571 = vmatpush1.msra.mxu0 0.0
        %572 = vmatprep.subr.mxu0 0.0
        %573 = vmatpush1.msra.mxu0 0.0
        %574 = vmatprep.subr.mxu0 0.0
        %575 = vmatpush1.msra.mxu0 0.0
        %576 = vmatprep.subr.mxu0 0.0
        %577 = vmatpush1.msra.mxu0 0.0
        %578 = vmatprep.subr.mxu0 0.0
        %579 = vmatpush1.msra.mxu0 0.0
        %580 = vmatprep.subr.mxu0 0.0
        %581 = vmatpush1.msra.mxu0 0.0
        %582 = vmatprep.mubr.f32.mxu0 0.0
        %583 = vmatmul.mubr.f32.gmra.mrb[0].mxu0 %v509
        %v584 = vpop.f32.mrb[0].mxu0
        %v585 = vadd.f32 0.0, %v584
        %v586 = vpop.f32.mrb[0].mxu0
        %587 = vmatprep.mubr.f32.mxu0 0.0
        %588 = vmatmul.mubr.f32.gmra.mrb[0].mxu0 %v512
        %v589 = vpop.f32.mrb[0].mxu0
        %v590 = vadd.f32 0.0, %v589
        %v591 = vpop.f32.mrb[0].mxu0
        %592 = vdwg.mxu0
        %595 = vrot.lane.b32.xlu0 %v585, 1
        %v596 = vpop.permute.xlu0 %595
        %597 = vrot.lane.b32.xlu0 %v590, 1
        %v598 = vpop.permute.xlu0 %597
        %v601 = vsel %vm386, 0.0, %v596
        %v602 = vsel %vm386, 0.0, %v598
        %vm603 = vcmask 72704
        %v604 = vsel %vm603, %v601, 0.0
        %v605 = vsel %vm603, %v602, 0.0
        %608 = vrot.lane.b32.xlu0 %v604, 127
        %v609 = vpop.permute.xlu0 %608
        %610 = vrot.lane.b32.xlu0 %v605, 127
        %v611 = vpop.permute.xlu0 %610
        %614 = vrot.lane.b32.xlu0 %v604, 126
        %v615 = vpop.permute.xlu0 %614
        %616 = vrot.lane.b32.xlu0 %v605, 126
        %v617 = vpop.permute.xlu0 %616
        %v620 = vld [vmem:[%s4] sm:$0xff]
        %v621 = vld [vmem:[%s4 + $0x8] sm:$0xff]
        %v622 = vld [vmem:[%s4 + $0x10] sm:$0xff]
        %v623 = vld [vmem:[%s4 + $0x18] sm:$0xff]
        %v624 = vld [vmem:[%s5] sm:$0xff]
        %v625 = vld [vmem:[%s5 + $0x8] sm:$0xff]
        %v626 = vld [vmem:[%s5 + $0x10] sm:$0xff]
        %v627 = vld [vmem:[%s5 + $0x18] sm:$0xff]
        %629 = vset.pattern.permute.xlu0 0
        %630 = vperm.xlu0 %629, %v624
        %v631 = vpop.permute.xlu0 %630
        %634 = vset.pattern.permute.xlu0 0
        %635 = vperm.xlu0 %634, %v625
        %v636 = vpop.permute.xlu0 %635
        %639 = vset.pattern.permute.xlu0 0
        %640 = vperm.xlu0 %639, %v626
        %v641 = vpop.permute.xlu0 %640
        %644 = vset.pattern.permute.xlu0 0
        %645 = vperm.xlu0 %644, %v627
        %v646 = vpop.permute.xlu0 %645
        %vm648 = vcmask 392192
        %v650 = vsel %vm648, %v620, 0
        %v653 = vsel %vm648, %v621, 0
        %v656 = vsel %vm648, %v622, 0
        %v659 = vsel %vm648, %v623, 0
        %661 = vmatprep.subr.mxu0 0.0
        %662 = vmatpush1.msra.mxu0 %v604
        %663 = vmatprep.subr.mxu0 0.0
        %664 = vmatpush1.msra.mxu0 %v605
        %665 = vmatprep.subr.mxu0 0.0
        %666 = vmatpush1.msra.mxu0 %v609
        %667 = vmatprep.subr.mxu0 0.0
        %668 = vmatpush1.msra.mxu0 %v611
        %669 = vmatprep.subr.mxu0 0.0
        %670 = vmatpush1.msra.mxu0 %v615
        %671 = vmatprep.subr.mxu0 0.0
        %672 = vmatpush1.msra.mxu0 %v617
        %673 = vmatprep.subr.mxu0 0.0
        %674 = vmatpush1.msra.mxu0 0.0
        %675 = vmatprep.subr.mxu0 0.0
        %676 = vmatpush1.msra.mxu0 0.0
        %677 = vmatprep.subr.mxu0 0.0
        %678 = vmatpush1.msra.mxu0 0.0
        %679 = vmatprep.subr.mxu0 0.0
        %680 = vmatpush1.msra.mxu0 0.0
        %681 = vmatprep.subr.mxu0 0.0
        %682 = vmatpush1.msra.mxu0 0.0
        %683 = vmatprep.subr.mxu0 0.0
        %684 = vmatpush1.msra.mxu0 0.0
        %685 = vmatprep.subr.mxu0 0.0
        %686 = vmatpush1.msra.mxu0 0.0
        %687 = vmatprep.subr.mxu0 0.0
        %688 = vmatpush1.msra.mxu0 0.0
        %689 = vmatprep.subr.mxu0 0.0
        %690 = vmatpush1.msra.mxu0 0.0
        %691 = vmatprep.subr.mxu0 0.0
        %692 = vmatpush1.msra.mxu0 0.0
        %693 = vmatprep.subr.mxu0 0.0
        %694 = vmatpush1.msra.mxu0 0.0
        %695 = vmatprep.subr.mxu0 0.0
        %696 = vmatpush1.msra.mxu0 0.0
        %697 = vmatprep.subr.mxu0 0.0
        %698 = vmatpush1.msra.mxu0 0.0
        %699 = vmatprep.subr.mxu0 0.0
        %700 = vmatpush1.msra.mxu0 0.0
        %701 = vmatprep.subr.mxu0 0.0
        %702 = vmatpush1.msra.mxu0 0.0
        %703 = vmatprep.subr.mxu0 0.0
        %704 = vmatpush1.msra.mxu0 0.0
        %705 = vmatprep.subr.mxu0 0.0
        %706 = vmatpush1.msra.mxu0 0.0
        %707 = vmatprep.subr.mxu0 0.0
        %708 = vmatpush1.msra.mxu0 0.0
        %709 = vmatprep.subr.mxu0 0.0
        %710 = vmatpush1.msra.mxu0 0.0
        %711 = vmatprep.subr.mxu0 0.0
        %712 = vmatpush1.msra.mxu0 0.0
        %713 = vmatprep.subr.mxu0 0.0
        %714 = vmatpush1.msra.mxu0 0.0
        %715 = vmatprep.subr.mxu0 0.0
        %716 = vmatpush1.msra.mxu0 0.0
        %717 = vmatprep.subr.mxu0 0.0
        %718 = vmatpush1.msra.mxu0 0.0
        %719 = vmatprep.subr.mxu0 0.0
        %720 = vmatpush1.msra.mxu0 0.0
        %721 = vmatprep.subr.mxu0 0.0
        %722 = vmatpush1.msra.mxu0 0.0
        %723 = vmatprep.subr.mxu0 0.0
        %724 = vmatpush1.msra.mxu0 0.0
        %725 = vmatprep.mubr.f32.mxu0 0.0
        %726 = vmatmul.mubr.f32.gmra.mrb[0].mxu0 %v650
        %v727 = vpop.f32.mrb[0].mxu0
        %v728 = vadd.f32 %v631, %v727
        %v729 = vpop.f32.mrb[0].mxu0
        %730 = vmatprep.mubr.f32.mxu0 0.0
        %731 = vmatmul.mubr.f32.gmra.mrb[0].mxu0 %v653
        %v732 = vpop.f32.mrb[0].mxu0
        %v733 = vadd.f32 %v636, %v732
        %v734 = vpop.f32.mrb[0].mxu0
        %735 = vmatprep.mubr.f32.mxu0 0.0
        %736 = vmatmul.mubr.f32.gmra.mrb[0].mxu0 %v656
        %v737 = vpop.f32.mrb[0].mxu0
        %v738 = vadd.f32 %v641, %v737
        %v739 = vpop.f32.mrb[0].mxu0
        %740 = vmatprep.mubr.f32.mxu0 0.0
        %741 = vmatmul.mubr.f32.gmra.mrb[0].mxu0 %v659
        %v742 = vpop.f32.mrb[0].mxu0
        %v743 = vadd.f32 %v646, %v742
        %v744 = vpop.f32.mrb[0].mxu0
        %745 = vdwg.mxu0
        %v746 = vmax.f32 %v728, 0.0
        %v747 = vmax.f32 %v733, 0.0
        %v748 = vmax.f32 %v738, 0.0
        %v749 = vmax.f32 %v743, 0.0
        %754 = vrot.lane.b32.xlu0 %v746, 127
        %v755 = vpop.permute.xlu0 %754
        %756 = vrot.lane.b32.xlu0 %v747, 127
        %v757 = vpop.permute.xlu0 %756
        %758 = vrot.lane.b32.xlu0 %v748, 127
        %v759 = vpop.permute.xlu0 %758
        %760 = vrot.lane.b32.xlu0 %v749, 127
        %v761 = vpop.permute.xlu0 %760
        %v766 = vmax.f32 %v746, %v755
        %v767 = vmax.f32 %v747, %v757
        %v768 = vmax.f32 %v748, %v759
        %v769 = vmax.f32 %v749, %v761
        %v770 = vld [vmem:[%s6] sm:$0x7f]
        %vm771 = vcmask 56320
        %v773 = vsel %vm771, %v766, 0
        %v776 = vsel %vm771, %v767, 0
        %v779 = vsel %vm771, %v768, 0
        %v782 = vsel %vm771, %v769, 0
        %v785 = vsel %vm514, %v770, 0
        %787 = vmatprep.subr.mxu0 0.0
        %788 = vmatpush1.msra.mxu0 %v785
        %789 = vmatprep.subr.mxu0 0.0
        %790 = vmatpush1.msra.mxu0 0.0
        %791 = vmatprep.subr.mxu0 0.0
        %792 = vmatpush1.msra.mxu0 0.0
        %793 = vmatprep.subr.mxu0 0.0
        %794 = vmatpush1.msra.mxu0 0.0
        %795 = vmatprep.subr.mxu0 0.0
        %796 = vmatpush1.msra.mxu0 0.0
        %797 = vmatprep.subr.mxu0 0.0
        %798 = vmatpush1.msra.mxu0 0.0
        %799 = vmatprep.subr.mxu0 0.0
        %800 = vmatpush1.msra.mxu0 0.0
        %801 = vmatprep.subr.mxu0 0.0
        %802 = vmatpush1.msra.mxu0 0.0
        %803 = vmatprep.subr.mxu0 0.0
        %804 = vmatpush1.msra.mxu0 0.0
        %805 = vmatprep.subr.mxu0 0.0
        %806 = vmatpush1.msra.mxu0 0.0
        %807 = vmatprep.subr.mxu0 0.0
        %808 = vmatpush1.msra.mxu0 0.0
        %809 = vmatprep.subr.mxu0 0.0
        %810 = vmatpush1.msra.mxu0 0.0
        %811 = vmatprep.subr.mxu0 0.0
        %812 = vmatpush1.msra.mxu0 0.0
        %813 = vmatprep.subr.mxu0 0.0
        %814 = vmatpush1.msra.mxu0 0.0
        %815 = vmatprep.subr.mxu0 0.0
        %816 = vmatpush1.msra.mxu0 0.0
        %817 = vmatprep.subr.mxu0 0.0
        %818 = vmatpush1.msra.mxu0 0.0
        %819 = vmatprep.subr.mxu0 0.0
        %820 = vmatpush1.msra.mxu0 0.0
        %821 = vmatprep.subr.mxu0 0.0
        %822 = vmatpush1.msra.mxu0 0.0
        %823 = vmatprep.subr.mxu0 0.0
        %824 = vmatpush1.msra.mxu0 0.0
        %825 = vmatprep.subr.mxu0 0.0
        %826 = vmatpush1.msra.mxu0 0.0
        %827 = vmatprep.subr.mxu0 0.0
        %828 = vmatpush1.msra.mxu0 0.0
        %829 = vmatprep.subr.mxu0 0.0
        %830 = vmatpush1.msra.mxu0 0.0
        %831 = vmatprep.subr.mxu0 0.0
        %832 = vmatpush1.msra.mxu0 0.0
        %833 = vmatprep.subr.mxu0 0.0
        %834 = vmatpush1.msra.mxu0 0.0
        %835 = vmatprep.subr.mxu0 0.0
        %836 = vmatpush1.msra.mxu0 0.0
        %837 = vmatprep.subr.mxu0 0.0
        %838 = vmatpush1.msra.mxu0 0.0
        %839 = vmatprep.subr.mxu0 0.0
        %840 = vmatpush1.msra.mxu0 0.0
        %841 = vmatprep.subr.mxu0 0.0
        %842 = vmatpush1.msra.mxu0 0.0
        %843 = vmatprep.subr.mxu0 0.0
        %844 = vmatpush1.msra.mxu0 0.0
        %845 = vmatprep.subr.mxu0 0.0
        %846 = vmatpush1.msra.mxu0 0.0
        %847 = vmatprep.subr.mxu0 0.0
        %848 = vmatpush1.msra.mxu0 0.0
        %849 = vmatprep.subr.mxu0 0.0
        %850 = vmatpush1.msra.mxu0 0.0
        %851 = vmatprep.mubr.f32.mxu0 0.0
        %852 = vmatmul.mubr.f32.gmra.mrb[0].mxu0 %v773
        %v853 = vpop.f32.mrb[0].mxu0
        %v854 = vadd.f32 0.0, %v853
        %v855 = vpop.f32.mrb[0].mxu0
        %856 = vmatprep.mubr.f32.mxu0 0.0
        %857 = vmatmul.mubr.f32.gmra.mrb[0].mxu0 %v776
        %v858 = vpop.f32.mrb[0].mxu0
        %v859 = vadd.f32 0.0, %v858
        %v860 = vpop.f32.mrb[0].mxu0
        %861 = vmatprep.mubr.f32.mxu0 0.0
        %862 = vmatmul.mubr.f32.gmra.mrb[0].mxu0 %v779
        %v863 = vpop.f32.mrb[0].mxu0
        %v864 = vadd.f32 0.0, %v863
        %v865 = vpop.f32.mrb[0].mxu0
        %866 = vmatprep.mubr.f32.mxu0 0.0
        %867 = vmatmul.mubr.f32.gmra.mrb[0].mxu0 %v782
        %v868 = vpop.f32.mrb[0].mxu0
        %v869 = vadd.f32 0.0, %v868
        %v870 = vpop.f32.mrb[0].mxu0
        %871 = vdwg.mxu0
        %876 = vrot.lane.b32.xlu0 %v854, 127
        %v877 = vpop.permute.xlu0 %876
        %878 = vrot.lane.b32.xlu0 %v859, 127
        %v879 = vpop.permute.xlu0 %878
        %880 = vrot.lane.b32.xlu0 %v864, 127
        %v881 = vpop.permute.xlu0 %880
        %882 = vrot.lane.b32.xlu0 %v869, 127
        %v883 = vpop.permute.xlu0 %882
        %888 = vrot.lane.b32.xlu0 %v854, 126
        %v889 = vpop.permute.xlu0 %888
        %890 = vrot.lane.b32.xlu0 %v859, 126
        %v891 = vpop.permute.xlu0 %890
        %892 = vrot.lane.b32.xlu0 %v864, 126
        %v893 = vpop.permute.xlu0 %892
        %894 = vrot.lane.b32.xlu0 %v869, 126
        %v895 = vpop.permute.xlu0 %894
        %900 = vrot.lane.b32.xlu0 %v854, 125
        %v901 = vpop.permute.xlu0 %900
        %902 = vrot.lane.b32.xlu0 %v859, 125
        %v903 = vpop.permute.xlu0 %902
        %904 = vrot.lane.b32.xlu0 %v864, 125
        %v905 = vpop.permute.xlu0 %904
        %906 = vrot.lane.b32.xlu0 %v869, 125
        %v907 = vpop.permute.xlu0 %906
        %912 = vxpose.xlu0.b32.start [1/16] %v854, 128
        %913 = vxpose.xlu0.b32.cont [2/16] %v859, 128
        %914 = vxpose.xlu0.b32.cont [3/16] %v864, 128
        %915 = vxpose.xlu0.b32.cont [4/16] %v869, 128
        %916 = vxpose.xlu0.b32.cont [5/16] %v877, 128
        %917 = vxpose.xlu0.b32.cont [6/16] %v879, 128
        %918 = vxpose.xlu0.b32.cont [7/16] %v881, 128
        %919 = vxpose.xlu0.b32.cont [8/16] %v883, 128
        %920 = vxpose.xlu0.b32.cont [9/16] %v889, 128
        %921 = vxpose.xlu0.b32.cont [10/16] %v891, 128
        %922 = vxpose.xlu0.b32.cont [11/16] %v893, 128
        %923 = vxpose.xlu0.b32.cont [12/16] %v895, 128
        %924 = vxpose.xlu0.b32.cont [13/16] %v901, 128
        %925 = vxpose.xlu0.b32.cont [14/16] %v903, 128
        %926 = vxpose.xlu0.b32.cont [15/16] %v905, 128
        %927 = vxpose.xlu0.b32.end [16/16] %v907, 128
        %v928 = vpop.trf.xlu0
        %v929 = vpop.trf.xlu0
        %v930 = vpop.trf.xlu0
        %v931 = vpop.trf.xlu0
        %v932 = vpop.trf.xlu0
        %v933 = vpop.trf.xlu0
        %v934 = vpop.trf.xlu0
        %v935 = vpop.trf.xlu0
        %v936 = vpop.trf.xlu0
        %v937 = vpop.trf.xlu0
        %v938 = vpop.trf.xlu0
        %v939 = vpop.trf.xlu0
        %v940 = vpop.trf.xlu0
        %v941 = vpop.trf.xlu0
        %v942 = vpop.trf.xlu0
        %v943 = vpop.trf.xlu0
        %v944 = vld [vmem:[%s7] sm:$0xff]
        %v945 = vld [vmem:[%s7 + $0x8] sm:$0xff]
        %v946 = vld [vmem:[%s7 + $0x10] sm:$0xff]
        %v947 = vld [vmem:[%s7 + $0x18] sm:$0xff]
        %v948 = vld [vmem:[%s7 + $0x20] sm:$0xff]
        %v949 = vld [vmem:[%s7 + $0x28] sm:$0xff]
        %v950 = vld [vmem:[%s7 + $0x30] sm:$0xff]
        %v951 = vld [vmem:[%s7 + $0x38] sm:$0xff]
        %v952 = vld [vmem:[%s7 + $0x40] sm:$0xff]
        %v953 = vld [vmem:[%s7 + $0x48] sm:$0xff]
        %v954 = vld [vmem:[%s7 + $0x50] sm:$0xff]
        %v955 = vld [vmem:[%s7 + $0x58] sm:$0xff]
        %v956 = vld [vmem:[%s7 + $0x60] sm:$0xff]
        %v957 = vld [vmem:[%s7 + $0x68] sm:$0xff]
        %v958 = vld [vmem:[%s7 + $0x70] sm:$0xff]
        %v959 = vld [vmem:[%s7 + $0x78] sm:$0xff]
        %v960 = vld [vmem:[%s8] sm:$0x1]
        %961 = vmatprep.subr.mxu0 0.0
        %962 = vmatpush1.msra.mxu0 %v944
        %963 = vmatprep.subr.mxu0 0.0
        %964 = vmatpush1.msra.mxu0 %v945
        %965 = vmatprep.subr.mxu0 0.0
        %966 = vmatpush1.msra.mxu0 %v946
        %967 = vmatprep.subr.mxu0 0.0
        %968 = vmatpush1.msra.mxu0 %v947
        %969 = vmatprep.subr.mxu0 0.0
        %970 = vmatpush1.msra.mxu0 %v948
        %971 = vmatprep.subr.mxu0 0.0
        %972 = vmatpush1.msra.mxu0 %v949
        %973 = vmatprep.subr.mxu0 0.0
        %974 = vmatpush1.msra.mxu0 %v950
        %975 = vmatprep.subr.mxu0 0.0
        %976 = vmatpush1.msra.mxu0 %v951
        %977 = vmatprep.subr.mxu0 0.0
        %978 = vmatpush1.msra.mxu0 %v952
        %979 = vmatprep.subr.mxu0 0.0
        %980 = vmatpush1.msra.mxu0 %v953
        %981 = vmatprep.subr.mxu0 0.0
        %982 = vmatpush1.msra.mxu0 %v954
        %983 = vmatprep.subr.mxu0 0.0
        %984 = vmatpush1.msra.mxu0 %v955
        %985 = vmatprep.subr.mxu0 0.0
        %986 = vmatpush1.msra.mxu0 %v956
        %987 = vmatprep.subr.mxu0 0.0
        %988 = vmatpush1.msra.mxu0 %v957
        %989 = vmatprep.subr.mxu0 0.0
        %990 = vmatpush1.msra.mxu0 %v958
        %991 = vmatprep.subr.mxu0 0.0
        %992 = vmatpush1.msra.mxu0 %v959
        %993 = vmatprep.subr.mxu0 0.0
        %994 = vmatpush1.msra.mxu0 0.0
        %995 = vmatprep.subr.mxu0 0.0
        %996 = vmatpush1.msra.mxu0 0.0
        %997 = vmatprep.subr.mxu0 0.0
        %998 = vmatpush1.msra.mxu0 0.0
        %999 = vmatprep.subr.mxu0 0.0
        %1000 = vmatpush1.msra.mxu0 0.0
        %1001 = vmatprep.subr.mxu0 0.0
        %1002 = vmatpush1.msra.mxu0 0.0
        %1003 = vmatprep.subr.mxu0 0.0
        %1004 = vmatpush1.msra.mxu0 0.0
        %1005 = vmatprep.subr.mxu0 0.0
        %1006 = vmatpush1.msra.mxu0 0.0
        %1007 = vmatprep.subr.mxu0 0.0
        %1008 = vmatpush1.msra.mxu0 0.0
        %1009 = vmatprep.subr.mxu0 0.0
        %1010 = vmatpush1.msra.mxu0 0.0
        %1011 = vmatprep.subr.mxu0 0.0
        %1012 = vmatpush1.msra.mxu0 0.0
        %1013 = vmatprep.subr.mxu0 0.0
        %1014 = vmatpush1.msra.mxu0 0.0
        %1015 = vmatprep.subr.mxu0 0.0
        %1016 = vmatpush1.msra.mxu0 0.0
        %1017 = vmatprep.subr.mxu0 0.0
        %1018 = vmatpush1.msra.mxu0 0.0
        %1019 = vmatprep.subr.mxu0 0.0
        %1020 = vmatpush1.msra.mxu0 0.0
        %1021 = vmatprep.subr.mxu0 0.0
        %1022 = vmatpush1.msra.mxu0 0.0
        %1023 = vmatprep.subr.mxu0 0.0
        %1024 = vmatpush1.msra.mxu0 0.0
        %1025 = vmatprep.mubr.f32.mxu0 0.0
        %1026 = vmatmul.mubr.f32.gmra.mrb[0].mxu0 %v928
        %v1027 = vpop.f32.mrb[0].mxu0
        %v1028 = vadd.f32 %v960, %v1027
        %v1029 = vpop.f32.mrb[0].mxu0
        %1030 = vdwg.mxu0
        %v1031 = vmax.f32 %v1028, 0.0
        %v1032 = vld [vmem:[%s9] sm:$0xff]
        %v1033 = vld [vmem:[%s9 + $0x8] sm:$0xff]
        %v1034 = vld [vmem:[%s9 + $0x10] sm:$0xff]
        %v1035 = vld [vmem:[%s9 + $0x18] sm:$0xff]
        %v1036 = vld [vmem:[%s9 + $0x20] sm:$0xff]
        %v1037 = vld [vmem:[%s9 + $0x28] sm:$0xff]
        %v1038 = vld [vmem:[%s9 + $0x30] sm:$0xff]
        %v1039 = vld [vmem:[%s9 + $0x38] sm:$0xff]
        %v1040 = vld [vmem:[%s10] sm:$0x1]
        %vm1041 = vcmask 523264
        %v1043 = vsel %vm1041, %v1031, 0
        %1045 = vmatprep.subr.mxu0 0.0
        %1046 = vmatpush1.msra.mxu0 %v1032
        %1047 = vmatprep.subr.mxu0 0.0
        %1048 = vmatpush1.msra.mxu0 %v1033
        %1049 = vmatprep.subr.mxu0 0.0
        %1050 = vmatpush1.msra.mxu0 %v1034
        %1051 = vmatprep.subr.mxu0 0.0
        %1052 = vmatpush1.msra.mxu0 %v1035
        %1053 = vmatprep.subr.mxu0 0.0
        %1054 = vmatpush1.msra.mxu0 %v1036
        %1055 = vmatprep.subr.mxu0 0.0
        %1056 = vmatpush1.msra.mxu0 %v1037
        %1057 = vmatprep.subr.mxu0 0.0
        %1058 = vmatpush1.msra.mxu0 %v1038
        %1059 = vmatprep.subr.mxu0 0.0
        %1060 = vmatpush1.msra.mxu0 %v1039
        %1061 = vmatprep.subr.mxu0 0.0
        %1062 = vmatpush1.msra.mxu0 0.0
        %1063 = vmatprep.subr.mxu0 0.0
        %1064 = vmatpush1.msra.mxu0 0.0
        %1065 = vmatprep.subr.mxu0 0.0
        %1066 = vmatpush1.msra.mxu0 0.0
        %1067 = vmatprep.subr.mxu0 0.0
        %1068 = vmatpush1.msra.mxu0 0.0
        %1069 = vmatprep.subr.mxu0 0.0
        %1070 = vmatpush1.msra.mxu0 0.0
        %1071 = vmatprep.subr.mxu0 0.0
        %1072 = vmatpush1.msra.mxu0 0.0
        %1073 = vmatprep.subr.mxu0 0.0
        %1074 = vmatpush1.msra.mxu0 0.0
        %1075 = vmatprep.subr.mxu0 0.0
        %1076 = vmatpush1.msra.mxu0 0.0
        %1077 = vmatprep.subr.mxu0 0.0
        %1078 = vmatpush1.msra.mxu0 0.0
        %1079 = vmatprep.subr.mxu0 0.0
        %1080 = vmatpush1.msra.mxu0 0.0
        %1081 = vmatprep.subr.mxu0 0.0
        %1082 = vmatpush1.msra.mxu0 0.0
        %1083 = vmatprep.subr.mxu0 0.0
        %1084 = vmatpush1.msra.mxu0 0.0
        %1085 = vmatprep.subr.mxu0 0.0
        %1086 = vmatpush1.msra.mxu0 0.0
        %1087 = vmatprep.subr.mxu0 0.0
        %1088 = vmatpush1.msra.mxu0 0.0
        %1089 = vmatprep.subr.mxu0 0.0
        %1090 = vmatpush1.msra.mxu0 0.0
        %1091 = vmatprep.subr.mxu0 0.0
        %1092 = vmatpush1.msra.mxu0 0.0
        %1093 = vmatprep.subr.mxu0 0.0
        %1094 = vmatpush1.msra.mxu0 0.0
        %1095 = vmatprep.subr.mxu0 0.0
        %1096 = vmatpush1.msra.mxu0 0.0
        %1097 = vmatprep.subr.mxu0 0.0
        %1098 = vmatpush1.msra.mxu0 0.0
        %1099 = vmatprep.subr.mxu0 0.0
        %1100 = vmatpush1.msra.mxu0 0.0
        %1101 = vmatprep.subr.mxu0 0.0
        %1102 = vmatpush1.msra.mxu0 0.0
        %1103 = vmatprep.subr.mxu0 0.0
        %1104 = vmatpush1.msra.mxu0 0.0
        %1105 = vmatprep.subr.mxu0 0.0
        %1106 = vmatpush1.msra.mxu0 0.0
        %1107 = vmatprep.subr.mxu0 0.0
        %1108 = vmatpush1.msra.mxu0 0.0
        %1109 = vmatprep.mubr.f32.mxu0 0.0
        %1110 = vmatmul.mubr.f32.gmra.mrb[0].mxu0 %v1043
        %v1111 = vpop.f32.mrb[0].mxu0
        %v1112 = vadd.f32 %v1040, %v1111
        %v1113 = vpop.f32.mrb[0].mxu0
        %1114 = vdwg.mxu0
        %v1115 = vmax.f32 %v1112, 0.0
        %vm1116 = vcmask 73728
        %1117 = vst.msk [vmem:[%s376] sm:$0x1] %vm1116, %v1115
        %s1118 = sand.u32 %s269, 1
        %s1119 = scalar_lea.sflag [#allocation3], %s1118
        %s1120 = sand.u32 %s269, 1
        %s1121 = scalar_lea.vmem [#allocation2], %s1120
        // Predicated region
        $region65: #{tpu_custom_call.1} parent=63 // pred_check
          %p1122 = pneg %p279
        $region66: #{tpu_custom_call.1} parent=63 // pred_check_branch
          %1124 = sbr.rel (%p1122) target = $region68
        $region67: #{tpu_custom_call.1} parent=63 // pred_region
          %s1126 = ssub.s32 16, 16
          %1127 = vsyncadd %s1119, %s1126
          %s1128 = smul.addr %s25, 16
          %s1129 = scalar_lea.hbm %s11, %s1128
          %s1131 = sshll.u32 %s1121, 4
          %s1132 = int_to_ptr.vmem [resolvable:$true] %s1131
          %1134 = dma.vmem_to_hbm [thread:$0]  %s1132, 16, %s1129, %s1119
        $region68: #{tpu_custom_call.1} parent=63 // pred_fallthru
          _
      $region64: #{tpu_custom_call.1} parent=5 // pred_fallthru
        _
      %p1135 = scmp.le.s32.totalorder 2, %s20
      // Predicated region
      $region69: #{tpu_custom_call.1} parent=5 // pred_check
        %p1136 = pneg %p1135
      $region70: #{tpu_custom_call.1} parent=5 // pred_check_branch
        %1138 = sbr.rel (%p1136) target = $region72
      $region71: #{tpu_custom_call.1} parent=5 // pred_region
        %s1139 = ssub.s32 %s20, 2
        // Predicated region
        $region73: #{tpu_custom_call.1} parent=71 // pred_check
          %p1140 = pneg %p285
        $region74: #{tpu_custom_call.1} parent=71 // pred_check_branch
          %1142 = sbr.rel (%p1140) target = $region76
        $region75: #{tpu_custom_call.1} parent=71 // pred_region
          %s1143 = sand.u32 %s270, 1
          %s1144 = scalar_lea.sflag [#allocation3], %s1143
          %s1145 = sand.u32 %s270, 1
          %s1146 = scalar_lea.vmem [#allocation2], %s1145
          %1147 = dma.done %s1144, 16
        $region76: #{tpu_custom_call.1} parent=71 // pred_fallthru
          _
      $region72: #{tpu_custom_call.1} parent=5 // pred_fallthru
        _
    $region6: #{tpu_custom_call.1} parent=1 // loop_footer
      %s24 = sadd.s32 1, %s20
    $region7: #{tpu_custom_call.1} parent=1 // loop_footer_branch
      %19 = sbr.rel target = $region3
    $region8: #{tpu_custom_call.1} parent=1 // loop_exit
      _
    %1148 = vsyncpa [#allocation3], 1
    %s1149 = scalar_lea.sflag [#allocation3], 1
    %1150 = vsyncpa %s1149, 1

</llo_original>
